<compile_context>
chip_gen: v7x
topology: tpu7x:2x2x1
jax: 0.10.0
libtpu: 0.0.40
codegen_flags: <defaults>
</compile_context>

<pallas_src>
import functools

import jax
import jax.numpy as jnp
from jax.experimental import pallas as pl
from jax.experimental.pallas import tpu as pltpu


def _round_up(x, m):
    return ((x + m - 1) // m) * m


def _cdiv(a, b):
    return -(-a // b)


def _vmem_capacity_bytes():
    try:
        info = pltpu.get_tpu_info()
        for name in ("vmem_capacity_bytes", "vmem_bytes", "vmem_size_bytes"):
            v = getattr(info, name, None)
            if v:
                return int(v)
    except Exception:
        pass
    return 64 << 20  # conservative fallback: v7x per-TensorCore VMEM


def _choose_k_tile(D, max_tk):
    """Largest multiple of 128 <= max_tk that divides D, else whole D."""
    if D <= max_tk or D % 128 != 0:
        return D
    n128 = D // 128
    best = D
    for m in range(1, n128 + 1):
        tk = 128 * m
        if tk > max_tk:
            break
        if n128 % m == 0:
            best = tk
    return best


def _choose_tiles(B, D, H, x_itemsize, w_itemsize, budget, tile_b):
    # K tile: only split when D is large; keep w1 blocks modest.
    tk = _choose_k_tile(D, max_tk=2048)

    # VMEM per batch row: double-buffered x block, f32 h_acc scratch,
    # double-buffered lane-padded (tb,1) output column.
    per_row = 2 * tk * x_itemsize + H * 4 + 2 * 128 * 4
    fixed = 2 * tk * H * w_itemsize + (256 << 10)  # w1 double-buffer + vectors
    tb_vmem = max(8, ((budget - fixed) // per_row) // 8 * 8)

    # Target ~2 MiB of streamed x per grid step.
    tb_target = _round_up(max(8, _cdiv(2 << 20, tk * x_itemsize)), 8)

    cap_tb = B if B <= 8 else (B // 8) * 8
    tb = min(tb_target, tb_vmem, cap_tb)
    if tile_b is not None:
        tb = min(max(8, _round_up(tile_b, 8)), tb_vmem, cap_tb)
    tb = max(tb, 1)

    # v7x megacore: prefer >= 2 batch steps so both TensorCores get work.
    if B > 8 and _cdiv(B, tb) < 2:
        tb = min(tb, max(8, _round_up(_cdiv(B, 2), 8)))
    return tb, tk


def _disc_kernel(x_ref, w1_ref, b1_ref, w2_ref, b2_ref, o_ref, h_acc):
    k = pl.program_id(1)

    @pl.when(k == 0)
    def _():
        h_acc[...] = jnp.zeros_like(h_acc)

    # Layer-1 partial product on the MXU; accumulate in f32 VMEM scratch.
    h_acc[...] += jnp.dot(x_ref[...], w1_ref[...],
                          preferred_element_type=jnp.float32)

    @pl.when(k == pl.num_programs(1) - 1)
    def _():
        h = jnp.maximum(h_acc[...] + b1_ref[...], 0.0)
        # Layer 2 as a VPU multiply + XLU lane reduction (no N=1 MXU matmul).
        logits = jnp.sum(h * w2_ref[...], axis=-1, keepdims=True) + b2_ref[0]
        # Exact sigmoid: divide on a (tb, 1) column is negligible.
        o_ref[...] = (1.0 / (1.0 + jnp.exp(-logits))).astype(o_ref.dtype)


@functools.partial(jax.jit, static_argnames=("tile_b", "use_bf16"))
def discriminator_forward(x, w1, b1, w2, b2, *, tile_b=None, use_bf16=True):
    """x: (B, H, W) float32. Returns (B, 1) float32 in [0, 1]."""
    B = x.shape[0]
    x_flat = x.reshape(B, -1)                  # x.view(x.size(0), -1)
    D = x_flat.shape[1]
    H = w1.shape[1]                            # 128

    x_dtype = jnp.bfloat16 if use_bf16 else jnp.float32
    itemsize = jnp.dtype(x_dtype).itemsize
    # TODO(synk): in a full training pipeline the bf16 cast should fuse into
    # the producer of x instead of materializing here.
    x_in = x_flat.astype(x_dtype)
    w1_in = w1.astype(x_dtype)

    budget = int(_vmem_capacity_bytes()) * 3 // 4
    tb, tk = _choose_tiles(B, D, H, itemsize, itemsize, budget, tile_b)
    nb = _cdiv(B, tb)
    nk = D // tk

    b1_2d = b1.reshape(1, H).astype(jnp.float32)
    w2_row = w2.reshape(1, H).astype(jnp.float32)     # (128,1) -> (1,128) row
    b2_1d = b2.reshape(1).astype(jnp.float32)         # scalar via SMEM

    # Conservative VMEM estimate (counts BOTH pipeline buffers of every input).
    est = (2 * tb * tk * itemsize                      # x blocks
           + 2 * tk * H * itemsize                     # w1 blocks
           + tb * H * 4                                # h_acc scratch
           + 2 * tb * 128 * 4                          # (tb,1) out, lane-padded
           + (256 << 10))                              # b1 / w2 / slack
    vmem_limit = int(min(max(est + (4 << 20), 16 << 20), budget))

    out = pl.pallas_call(
        _disc_kernel,
        out_shape=jax.ShapeDtypeStruct((B, 1), jnp.float32),
        grid_spec=pltpu.PrefetchScalarGridSpec(
            num_scalar_prefetch=0,
            grid=(nb, nk),
            in_specs=[
                pl.BlockSpec((tb, tk), lambda i, k: (i, k)),   # x (streamed)
                pl.BlockSpec((tk, H), lambda i, k: (k, 0)),    # w1
                pl.BlockSpec((1, H), lambda i, k: (0, 0)),     # b1
                pl.BlockSpec((1, H), lambda i, k: (0, 0)),     # w2 as a row
                pl.BlockSpec(memory_space=pltpu.MemorySpace.SMEM),  # b2
            ],
            out_specs=pl.BlockSpec((tb, 1), lambda i, k: (i, 0)),
            scratch_shapes=[pltpu.VMEM((tb, H), jnp.float32)],
        ),
        compiler_params=pltpu.CompilerParams(
            dimension_semantics=("parallel", "arbitrary"),
            vmem_limit_bytes=vmem_limit,
        ),
    )(x_in, w1_in, b1_2d, w2_row, b2_1d)
    return out


def init_params(key, input_dim, hidden=128):
    """Deterministic init matching nn.Linear's default U(-1/sqrt(fan_in), +)."""
    k1, k2, k3, k4 = jax.random.split(key, 4)
    bound1 = 1.0 / jnp.sqrt(input_dim)
    w1 = jax.random.uniform(k1, (input_dim, hidden), jnp.float32, -bound1, bound1)
    b1 = jax.random.uniform(k2, (hidden,), jnp.float32, -bound1, bound1)
    bound2 = 1.0 / jnp.sqrt(hidden)
    w2 = jax.random.uniform(k3, (hidden, 1), jnp.float32, -bound2, bound2)
    b2 = jax.random.uniform(k4, (1,), jnp.float32, -bound2, bound2)
    return w1, b1, w2, b2


if __name__ == "__main__":
    key = jax.random.PRNGKey(0)
    kx, kp = jax.random.split(key)

    # slice_shape = (16, 16) -> input_dim = 256; batch = 24 exercises the
    # no-pad partial-final-block path and a multi-step (2-step) batch grid.
    B, Hs, Ws = 24, 16, 16
    D = Hs * Ws

    x = jax.random.normal(kx, (B, Hs, Ws), jnp.float32)
    w1, b1, w2, b2 = init_params(kp, D)

    out = discriminator_forward(x, w1, b1, w2, b2)
    out = jax.block_until_ready(out)

    # Reference check in plain JAX (same math, f32 throughout).
    ref = jax.nn.sigmoid(
        jnp.maximum(x.reshape(B, D) @ w1 + b1, 0.0) @ w2 + b2)
    assert out.shape == (B, 1)
    # bf16 streamed operands (f32 accumulation) -> slightly loose tolerance.
    assert jnp.allclose(out, ref, atol=1e-2, rtol=1e-2), "mismatch vs reference"

    print("KERNEL_OK")
</pallas_src>

<mosaic_0001>
module attributes {stable_mosaic.version = 11 : i64} {
  func.func @_disc_kernel(%arg0: i32, %arg1: i32, %arg2: memref<16x256xbf16, #tpu.memory_space<vmem>>, %arg3: memref<256x128xbf16, #tpu.memory_space<vmem>>, %arg4: memref<1x128xf32, #tpu.memory_space<vmem>>, %arg5: memref<1x128xf32, #tpu.memory_space<vmem>>, %arg6: memref<1xf32, #tpu.memory_space<smem>>, %arg7: memref<16x1xf32, #tpu.memory_space<vmem>>, %arg8: memref<16x128xf32, #tpu.memory_space<vmem>>) attributes {dimension_semantics = [#tpu.dimension_semantics<parallel>, #tpu.dimension_semantics<arbitrary>], iteration_bounds = array<i64: 2, 1>, scalar_prefetch = 0 : i64, scratch_operands = 1 : i64, tpu.core_type = #tpu.core_type<tc>, window_params = [{transform_indices = @transform_0, window_bounds = array<i64: 16, 256>}, {transform_indices = @transform_1, window_bounds = array<i64: 256, 128>}, {pipeline_mode = #tpu.pipeline_mode<synchronous>, transform_indices = @transform_2, window_bounds = array<i64: 1, 128>}, {pipeline_mode = #tpu.pipeline_mode<synchronous>, transform_indices = @transform_3, window_bounds = array<i64: 1, 128>}, {transform_indices = @transform_4, window_bounds = array<i64: 1>}, {transform_indices = @transform_5, window_bounds = array<i64: 16, 1>}]} {
    %c0_i32 = arith.constant 0 : i32
    %0 = arith.cmpi eq, %arg1, %c0_i32 : i32
    %1 = arith.extui %0 : i1 to i32
    %c0_i32_0 = arith.constant 0 : i32
    %2 = arith.cmpi ne, %1, %c0_i32_0 : i32
    scf.if %2 {
      %cst_10 = arith.constant 0.000000e+00 : f32
      %12 = vector.broadcast %cst_10 : f32 to vector<16x128xf32>
      %c0_11 = arith.constant 0 : index
      %c0_12 = arith.constant 0 : index
      %13 = vector.load %arg8[%c0_11, %c0_12] : memref<16x128xf32, #tpu.memory_space<vmem>>, vector<16x128xf32>
      tpu.vector_store %arg8[%c0_11, %c0_12], %12 {strides = array<i32>} : memref<16x128xf32, #tpu.memory_space<vmem>>, vector<16x128xf32>,
    } else {
    }
    %c0 = arith.constant 0 : index
    %c0_1 = arith.constant 0 : index
    %3 = vector.load %arg8[%c0, %c0_1] : memref<16x128xf32, #tpu.memory_space<vmem>>, vector<16x128xf32>
    %c0_2 = arith.constant 0 : index
    %c0_3 = arith.constant 0 : index
    %4 = vector.load %arg2[%c0_2, %c0_3] : memref<16x256xbf16, #tpu.memory_space<vmem>>, vector<16x256xbf16>
    %c0_4 = arith.constant 0 : index
    %c0_5 = arith.constant 0 : index
    %5 = vector.load %arg3[%c0_4, %c0_5] : memref<256x128xbf16, #tpu.memory_space<vmem>>, vector<256x128xbf16>
    %cst = arith.constant dense<0.000000e+00> : vector<16x128xf32>
    %6 = tpu.matmul %4, %5, %cst {dimension_numbers = #tpu.dot_dimension_numbers<[1], [0], [0], [1], [0, 0, 1, 1], [], []>} : vector<16x256xbf16>, vector<256x128xbf16>, vector<16x128xf32> -> vector<16x128xf32>
    %7 = arith.addf %3, %6 : vector<16x128xf32>
    %c0_6 = arith.constant 0 : index
    %c0_7 = arith.constant 0 : index
    %8 = vector.load %arg8[%c0_6, %c0_7] : memref<16x128xf32, #tpu.memory_space<vmem>>, vector<16x128xf32>
    tpu.vector_store %arg8[%c0_6, %c0_7], %7 {strides = array<i32>} : memref<16x128xf32, #tpu.memory_space<vmem>>, vector<16x128xf32>,
    %c0_i32_8 = arith.constant 0 : i32
    %9 = arith.cmpi eq, %arg1, %c0_i32_8 : i32
    %10 = arith.extui %9 : i1 to i32
    %c0_i32_9 = arith.constant 0 : i32
    %11 = arith.cmpi ne, %10, %c0_i32_9 : i32
    scf.if %11 {
      %c0_10 = arith.constant 0 : index
      %c0_11 = arith.constant 0 : index
      %12 = vector.load %arg8[%c0_10, %c0_11] : memref<16x128xf32, #tpu.memory_space<vmem>>, vector<16x128xf32>
      %c0_12 = arith.constant 0 : index
      %c0_13 = arith.constant 0 : index
      %13 = vector.load %arg4[%c0_12, %c0_13] : memref<1x128xf32, #tpu.memory_space<vmem>>, vector<1x128xf32>
      %14 = vector.broadcast %13 : vector<1x128xf32> to vector<16x128xf32>
      %15 = arith.addf %12, %14 : vector<16x128xf32>
      %cst_14 = arith.constant 0.000000e+00 : f32
      %16 = vector.broadcast %cst_14 : f32 to vector<16x128xf32>
      %17 = arith.maximumf %15, %16 : vector<16x128xf32>
      %c0_15 = arith.constant 0 : index
      %c0_16 = arith.constant 0 : index
      %18 = vector.load %arg5[%c0_15, %c0_16] : memref<1x128xf32, #tpu.memory_space<vmem>>, vector<1x128xf32>
      %19 = vector.broadcast %18 : vector<1x128xf32> to vector<16x128xf32>
      %20 = arith.mulf %17, %19 : vector<16x128xf32>
      %cst_17 = arith.constant dense<0.000000e+00> : vector<16xf32>
      %21 = vector.multi_reduction <add>, %20, %cst_17 [1] : vector<16x128xf32> to vector<16xf32>
      %22 = vector.shape_cast %21 : vector<16xf32> to vector<16x1xf32>
      %c0_18 = arith.constant 0 : index
      %23 = memref.load %arg6[%c0_18] : memref<1xf32, #tpu.memory_space<smem>>
      %24 = vector.broadcast %23 : f32 to vector<16x1xf32>
      %25 = arith.addf %22, %24 : vector<16x1xf32>
      %cst_19 = arith.constant 0.000000e+00 : f32
      %26 = vector.broadcast %cst_19 : f32 to vector<16x1xf32>
      %27 = arith.subf %26, %25 : vector<16x1xf32>
      %28 = math.exp %27 : vector<16x1xf32>
      %cst_20 = arith.constant 1.000000e+00 : f32
      %29 = vector.broadcast %cst_20 : f32 to vector<16x1xf32>
      %30 = arith.addf %29, %28 : vector<16x1xf32>
      %cst_21 = arith.constant 1.000000e+00 : f32
      %31 = vector.broadcast %cst_21 : f32 to vector<16x1xf32>
      %32 = arith.divf %31, %30 : vector<16x1xf32>
      %c0_22 = arith.constant 0 : index
      %c0_23 = arith.constant 0 : index
      %33 = vector.load %arg7[%c0_22, %c0_23] : memref<16x1xf32, #tpu.memory_space<vmem>>, vector<16x1xf32>
      tpu.vector_store %arg7[%c0_22, %c0_23], %32 {strides = array<i32>} : memref<16x1xf32, #tpu.memory_space<vmem>>, vector<16x1xf32>,
    } else {
    }
    return
  }
  func.func @transform_0(%arg0: i32, %arg1: i32) -> (i32, i32) {
    %c0_i32 = arith.constant 0 : i32
    return %arg0, %arg1 : i32, i32
  }
  func.func @transform_1(%arg0: i32, %arg1: i32) -> (i32, i32) {
    %c0_i32 = arith.constant 0 : i32
    %c0_i32_0 = arith.constant 0 : i32
    return %arg1, %c0_i32 : i32, i32
  }
  func.func @transform_2(%arg0: i32, %arg1: i32) -> (i32, i32) {
    %c0_i32 = arith.constant 0 : i32
    %c0_i32_0 = arith.constant 0 : i32
    %c0_i32_1 = arith.constant 0 : i32
    return %c0_i32, %c0_i32_0 : i32, i32
  }
  func.func @transform_3(%arg0: i32, %arg1: i32) -> (i32, i32) {
    %c0_i32 = arith.constant 0 : i32
    %c0_i32_0 = arith.constant 0 : i32
    %c0_i32_1 = arith.constant 0 : i32
    return %c0_i32, %c0_i32_0 : i32, i32
  }
  func.func @transform_4(%arg0: i32, %arg1: i32) -> i32 {
    %c0_i32 = arith.constant 0 : i32
    %c0_i32_0 = arith.constant 0 : i32
    return %c0_i32 : i32
  }
  func.func @transform_5(%arg0: i32, %arg1: i32) -> (i32, i32) {
    %c0_i32 = arith.constant 0 : i32
    %c0_i32_0 = arith.constant 0 : i32
    return %arg0, %c0_i32 : i32, i32
  }
}

</mosaic_0001>

<llo_original>
// kernel: discriminator_forward.1
$region0: #{discriminator_forward.1}
  #allocation0 [shape = 'u32[]', space=smem, size = 0x4, offset = 0x4, fixed_abs, tag = 'smem constant byte address 0x4 - core index']
  #allocation1 [shape = 'u32[144,128]{1,0:T(1,128)}', space=vmem, size = 0x12000, scoped, tag = 'internal scratch']
  #allocation2 [shape = 'f32[16,128]{1,0:T(8,128)}', space=vmem, size = 0x2000, scoped, tag = 'scratch operand']
  #allocation3 [shape = 'f32[1]{0:T(128)S(6)}', space=smem, size = 0x200, scoped, tag = 'scoped memory for discriminator_forward.1']
  %s0 = inlined_call_operand.vmem [shape: bf16[24,256], index: 0, kind: input, shape index: {}]
  %s1 = inlined_call_operand.vmem [shape: bf16[256,128], index: 1, kind: input, shape index: {}]
  %s2 = inlined_call_operand.vmem [shape: f32[1,128], index: 2, kind: input, shape index: {}]
  %s3 = inlined_call_operand.vmem [shape: f32[1,128], index: 3, kind: input, shape index: {}]
  %s4 = inlined_call_operand.<no memory space> [shape: f32[1], index: 4, kind: input, shape index: {}]
  %s5 = inlined_call_operand.vmem [shape: f32[24,1], index: 5, kind: output, shape index: {}]
  %s6 = sld [smem:[#allocation0]]
  $region109: #{discriminator_forward.1} parent=0
    _
  %s8 = ssub.s32 1, %s6
  %s9 = scalar_select 0, %s8, %s6
  %10 = sst [smem:[#allocation3]] %s4
  $region1: #{discriminator_forward.1} parent=0
    #allocation4 [shape = 'u8[16384]{0}', space=vmem, size = 0x4000, scoped, tag = 'output window, operand 0']
    loop: start=0, step=1, limit=4
    $region2: #{discriminator_forward.1} parent=1 // loop_pre_header
      _
    $region3: #{discriminator_forward.1} parent=1 // loop_header
      %s12 = sphi 0, %s16
      %p13 = scmp.ge.s32.totalorder %s12, 4
      %s19 = sphi 0, %s31
      %s20 = sphi 0, %s27
      %s21 = sphi 0, %s19
      %s22 = sphi 0, %s20
      %s23 = sphi 0, %s21
      %s24 = sphi 0, %s22
      %s36 = sphi 0, %s38
      %s39 = sphi 0, %s36
      %s40 = sphi 0, %s39
      %s56 = sphi 0, %s40
      %s62 = sphi 0, %s64
      %s65 = sphi 0, %s62
      %s66 = sphi 0, %s65
      %s82 = sphi 0, %s66
      %s86 = sphi 0, %s86
      %s88 = sphi 0, %s86
      %s89 = sphi 0, %s88
      %s103 = sphi 0, %s89
      %s107 = sphi 0, %s107
      %s109 = sphi 0, %s107
      %s110 = sphi 0, %s109
      %s124 = sphi 0, %s110
      %s128 = sphi 0, %s128
      %s130 = sphi 0, %s128
      %s131 = sphi 0, %s130
      %s145 = sphi 0, %s131
      %s151 = sphi 0, %s153
      %s154 = sphi 0, %s151
      %s155 = sphi 0, %s154
      %s171 = sphi 0, %s155
    $region4: #{discriminator_forward.1} parent=1 // loop_header_branch
      %15 = sbr.rel (%p13) target = $region8
    $region5: #{discriminator_forward.1} parent=1 // loop_body
      %s17 = ssub.s32 %s12, 1
      %s18 = ssub.s32 %s12, 2
      %s25 = sadd.s32 1, %s20
      %p26 = scmp.ge.s32.totalorder %s25, 1
      %s27 = scalar_select %p26, 0, %s25
      %s28 = sadd.s32 1, %s19
      %s29 = scalar_select %p26, %s28, %s19
      %p30 = scmp.ge.s32.totalorder %s29, 2
      %s31 = scalar_select %p30, 0, %s29
      %s32 = ssub.s32 %s19, %s31
      %s33 = ssub.s32 %s20, %s27
      %s34 = sor.u32 %s32, %s33
      %p35 = scmp.eq.s32.totalorder %s34, 0
      %s37 = sadd.s32 %s36, 1
      %s38 = scalar_select %p35, %s36, %s37
      %p41 = pneg %p35
      %p42 = scmp.eq.s32.totalorder %s12, 1
      %p43 = por %p41, %p42
      %p44 = scmp.ne.s32.totalorder %s36, %s39
      %p45 = scmp.eq.s32.totalorder %s12, 0
      %p46 = por %p44, %p45
      %p47 = scmp.ne.s32.totalorder %s36, %s39
      %p48 = scmp.eq.s32.totalorder %s17, 1
      %p49 = por %p47, %p48
      %p50 = scmp.ne.s32.totalorder %s39, %s40
      %p51 = scmp.eq.s32.totalorder %s17, 0
      %p52 = por %p50, %p51
      %p53 = scmp.ne.s32.totalorder %s39, %s40
      %p54 = scmp.eq.s32.totalorder %s18, 1
      %p55 = por %p53, %p54
      %p57 = scmp.ne.s32.totalorder %s40, %s56
      %p58 = scmp.eq.s32.totalorder %s18, 0
      %p59 = por %p57, %p58
      %s60 = ssub.s32 %s20, %s27
      %p61 = scmp.eq.s32.totalorder %s60, 0
      %s63 = sadd.s32 %s62, 1
      %s64 = scalar_select %p61, %s62, %s63
      %p67 = pneg %p61
      %p68 = scmp.eq.s32.totalorder %s12, 1
      %p69 = por %p67, %p68
      %p70 = scmp.ne.s32.totalorder %s62, %s65
      %p71 = scmp.eq.s32.totalorder %s12, 0
      %p72 = por %p70, %p71
      %p73 = scmp.ne.s32.totalorder %s62, %s65
      %p74 = scmp.eq.s32.totalorder %s17, 1
      %p75 = por %p73, %p74
      %p76 = scmp.ne.s32.totalorder %s65, %s66
      %p77 = scmp.eq.s32.totalorder %s17, 0
      %p78 = por %p76, %p77
      %p79 = scmp.ne.s32.totalorder %s65, %s66
      %p80 = scmp.eq.s32.totalorder %s18, 1
      %p81 = por %p79, %p80
      %p83 = scmp.ne.s32.totalorder %s66, %s82
      %p84 = scmp.eq.s32.totalorder %s18, 0
      %p85 = por %p83, %p84
      %s87 = sadd.s32 %s86, 1
      %p90 = scmp.eq.s32.totalorder %s12, 1
      %p91 = scmp.ne.s32.totalorder %s86, %s88
      %p92 = scmp.eq.s32.totalorder %s12, 0
      %p93 = por %p91, %p92
      %p94 = scmp.ne.s32.totalorder %s86, %s88
      %p95 = scmp.eq.s32.totalorder %s17, 1
      %p96 = por %p94, %p95
      %p97 = scmp.ne.s32.totalorder %s88, %s89
      %p98 = scmp.eq.s32.totalorder %s17, 0
      %p99 = por %p97, %p98
      %p100 = scmp.ne.s32.totalorder %s88, %s89
      %p101 = scmp.eq.s32.totalorder %s18, 1
      %p102 = por %p100, %p101
      %p104 = scmp.ne.s32.totalorder %s89, %s103
      %p105 = scmp.eq.s32.totalorder %s18, 0
      %p106 = por %p104, %p105
      %s108 = sadd.s32 %s107, 1
      %p111 = scmp.eq.s32.totalorder %s12, 1
      %p112 = scmp.ne.s32.totalorder %s107, %s109
      %p113 = scmp.eq.s32.totalorder %s12, 0
      %p114 = por %p112, %p113
      %p115 = scmp.ne.s32.totalorder %s107, %s109
      %p116 = scmp.eq.s32.totalorder %s17, 1
      %p117 = por %p115, %p116
      %p118 = scmp.ne.s32.totalorder %s109, %s110
      %p119 = scmp.eq.s32.totalorder %s17, 0
      %p120 = por %p118, %p119
      %p121 = scmp.ne.s32.totalorder %s109, %s110
      %p122 = scmp.eq.s32.totalorder %s18, 1
      %p123 = por %p121, %p122
      %p125 = scmp.ne.s32.totalorder %s110, %s124
      %p126 = scmp.eq.s32.totalorder %s18, 0
      %p127 = por %p125, %p126
      %s129 = sadd.s32 %s128, 1
      %p132 = scmp.eq.s32.totalorder %s12, 1
      %p133 = scmp.ne.s32.totalorder %s128, %s130
      %p134 = scmp.eq.s32.totalorder %s12, 0
      %p135 = por %p133, %p134
      %p136 = scmp.ne.s32.totalorder %s128, %s130
      %p137 = scmp.eq.s32.totalorder %s17, 1
      %p138 = por %p136, %p137
      %p139 = scmp.ne.s32.totalorder %s130, %s131
      %p140 = scmp.eq.s32.totalorder %s17, 0
      %p141 = por %p139, %p140
      %p142 = scmp.ne.s32.totalorder %s130, %s131
      %p143 = scmp.eq.s32.totalorder %s18, 1
      %p144 = por %p142, %p143
      %p146 = scmp.ne.s32.totalorder %s131, %s145
      %p147 = scmp.eq.s32.totalorder %s18, 0
      %p148 = por %p146, %p147
      %s149 = ssub.s32 %s19, %s31
      %p150 = scmp.eq.s32.totalorder %s149, 0
      %s152 = sadd.s32 %s151, 1
      %s153 = scalar_select %p150, %s151, %s152
      %p156 = pneg %p150
      %p157 = scmp.eq.s32.totalorder %s12, 1
      %p158 = por %p156, %p157
      %p159 = scmp.ne.s32.totalorder %s151, %s154
      %p160 = scmp.eq.s32.totalorder %s12, 0
      %p161 = por %p159, %p160
      %p162 = scmp.ne.s32.totalorder %s151, %s154
      %p163 = scmp.eq.s32.totalorder %s17, 1
      %p164 = por %p162, %p163
      %p165 = scmp.ne.s32.totalorder %s154, %s155
      %p166 = scmp.eq.s32.totalorder %s17, 0
      %p167 = por %p165, %p166
      %p168 = scmp.ne.s32.totalorder %s154, %s155
      %p169 = scmp.eq.s32.totalorder %s18, 1
      %p170 = por %p168, %p169
      %p172 = scmp.ne.s32.totalorder %s155, %s171
      %p173 = scmp.eq.s32.totalorder %s18, 0
      %p174 = por %p172, %p173
      %p175 = scmp.le.s32.totalorder 1, %s12
      %p176 = scmp.lt.s32.totalorder %s12, 3
      %p177 = pnand %p175, %p176
      %p178 = pneg %p177
      // Predicated region
      $region9: #{discriminator_forward.1} parent=5 // pred_check
        _
      $region10: #{discriminator_forward.1} parent=5 // pred_check_branch
        %180 = sbr.rel (%p177) target = $region12
      $region11: #{discriminator_forward.1} parent=5 // pred_region
        %s181 = ssub.s32 %s12, 1
        // Predicated region
        $region13: #{discriminator_forward.1} parent=11 // pred_check
          %p182 = pneg %p78
        $region14: #{discriminator_forward.1} parent=11 // pred_check_branch
          %184 = sbr.rel (%p182) target = $region16
        $region15: #{discriminator_forward.1} parent=11 // pred_region
          %s185 = smul.u32 32, %s22
          %p186 = scmp.lt.s32.totalorder %s185, 31
          %s187 = scalar_select %p186, %s185, 31
          %s188 = smul.addr %s187, 4
          %s189 = scalar_lea.vmem %s1, %s188
          %s190 = smul.u32 32, %s22
        $region16: #{discriminator_forward.1} parent=11 // pred_fallthru
          _
        // Predicated region
        $region17: #{discriminator_forward.1} parent=11 // pred_check
          %p191 = pneg %p99
        $region18: #{discriminator_forward.1} parent=11 // pred_check_branch
          %193 = sbr.rel (%p191) target = $region20
        $region19: #{discriminator_forward.1} parent=11 // pred_region
          _
        $region20: #{discriminator_forward.1} parent=11 // pred_fallthru
          _
        // Predicated region
        $region21: #{discriminator_forward.1} parent=11 // pred_check
          %p194 = pneg %p120
        $region22: #{discriminator_forward.1} parent=11 // pred_check_branch
          %196 = sbr.rel (%p194) target = $region24
        $region23: #{discriminator_forward.1} parent=11 // pred_region
          _
        $region24: #{discriminator_forward.1} parent=11 // pred_fallthru
          _
        // Predicated region
        $region25: #{discriminator_forward.1} parent=11 // pred_check
          %p197 = pneg %p141
        $region26: #{discriminator_forward.1} parent=11 // pred_check_branch
          %199 = sbr.rel (%p197) target = $region28
        $region27: #{discriminator_forward.1} parent=11 // pred_region
          _
        $region28: #{discriminator_forward.1} parent=11 // pred_fallthru
          _
      $region12: #{discriminator_forward.1} parent=5 // pred_fallthru
        _
      %p200 = scmp.lt.s32.totalorder %s12, 2
      // Predicated region
      $region29: #{discriminator_forward.1} parent=5 // pred_check
        %p201 = pneg %p200
      $region30: #{discriminator_forward.1} parent=5 // pred_check_branch
        %203 = sbr.rel (%p201) target = $region32
      $region31: #{discriminator_forward.1} parent=5 // pred_region
        // Predicated region
        $region33: #{discriminator_forward.1} parent=31 // pred_check
          %p204 = pneg %p46
        $region34: #{discriminator_forward.1} parent=31 // pred_check_branch
          %206 = sbr.rel (%p204) target = $region36
        $region35: #{discriminator_forward.1} parent=31 // pred_region
          %s207 = smul.u32 2, %s19
          %s208 = smul.u32 2, %s20
          %s209 = ssub.s32 3, %s207
          %p210 = scmp.lt.s32.totalorder %s209, 2
          %s211 = scalar_select %p210, %s209, 2
          %s212 = smul.u32 64, %s211
          %s213 = smul.u32 %s212, 2
          %p214 = scmp.lt.s32.totalorder %s207, 2
          %s215 = scalar_select %p214, %s207, 2
          %p216 = scmp.lt.s32.totalorder %s208, 1
          %s217 = scalar_select %p216, %s208, 1
          %s218 = smul.addr %s215, 2
          %s219 = sadd.s32 %s217, %s218
          %s220 = smul.addr %s219, 4
          %s221 = scalar_lea.vmem %s0, %s220
          %s222 = smul.u32 2, %s19
          %s223 = smul.u32 2, %s20
          %s224 = ssub.s32 3, %s222
          %p225 = scmp.lt.s32.totalorder %s224, 2
          %s226 = scalar_select %p225, %s224, 2
          %s227 = smul.u32 64, %s226
          %s228 = smul.u32 %s227, 2
        $region36: #{discriminator_forward.1} parent=31 // pred_fallthru
          _
      $region32: #{discriminator_forward.1} parent=5 // pred_fallthru
        _
      %p229 = scmp.le.s32.totalorder 1, %s12
      %p230 = scmp.lt.s32.totalorder %s12, 3
      %p231 = pnand %p229, %p230
      %p232 = pneg %p231
      // Predicated region
      $region37: #{discriminator_forward.1} parent=5 // pred_check
        _
      $region38: #{discriminator_forward.1} parent=5 // pred_check_branch
        %234 = sbr.rel (%p231) target = $region40
      $region39: #{discriminator_forward.1} parent=5 // pred_region
        %s235 = ssub.s32 %s12, 1
        %s236 = smul.u32 2, %s21
        %s237 = smul.u32 2, %s22
        %s238 = ssub.s32 3, %s236
        %p239 = scmp.lt.s32.totalorder %s238, 2
        %s240 = scalar_select %p239, %s238, 2
        %s241 = smul.u32 64, %s240
        %s242 = smul.u32 %s241, 2
        %p243 = scmp.lt.s32.totalorder %s236, 2
        %s244 = scalar_select %p243, %s236, 2
        %p245 = scmp.lt.s32.totalorder %s237, 1
        %s246 = scalar_select %p245, %s237, 1
        %s247 = smul.addr %s244, 2
        %s248 = sadd.s32 %s246, %s247
        %s249 = smul.addr %s248, 4
        %s250 = scalar_lea.vmem %s0, %s249
        %p251 = pneg %p52
        %p252 = pneg %p49
        %s253 = smul.u32 32, %s22
        %p254 = scmp.lt.s32.totalorder %s253, 31
        %s255 = scalar_select %p254, %s253, 31
        %s256 = smul.addr %s255, 4
        %s257 = scalar_lea.vmem %s1, %s256
        %p258 = pneg %p78
        %p259 = pneg %p75
        %p260 = pneg %p99
        %p261 = pneg %p96
        %p262 = pneg %p120
        %p263 = pneg %p117
        %p264 = pneg %p141
        %p265 = pneg %p138
        %p266 = pneg %p167
        %p267 = pneg %p164
        %s268 = sand.u32 %s154, 1
        %s269 = sand.u32 %s154, 1
        %s270 = smul.addr %s269, 16
        %s271 = scalar_lea.vmem [#allocation4], %s270
        %s272 = smul.u32 2, %s21
        %s273 = smul.u32 2, %s22
        %s274 = ssub.s32 3, %s272
        %p275 = scmp.lt.s32.totalorder %s274, 2
        %s276 = scalar_select %p275, %s274, 2
        %s277 = smul.u32 64, %s276
        %s278 = smul.u32 %s277, 2
        %p279 = scmp.lt.s32.totalorder %s272, 2
        %s280 = scalar_select %p279, %s272, 2
        %p281 = scmp.lt.s32.totalorder %s273, 1
        %s282 = scalar_select %p281, %s273, 1
        %s283 = smul.addr %s280, 2
        %s284 = sadd.s32 %s282, %s283
        %s285 = smul.addr %s284, 4
        %s286 = scalar_lea.vmem %s0, %s285
        %s287 = smul.u32 2, %s21
        %s288 = smul.u32 2, %s22
        %s289 = ssub.s32 3, %s287
        %p290 = scmp.lt.s32.totalorder %s289, 2
        %s291 = scalar_select %p290, %s289, 2
        %s292 = smul.u32 64, %s291
        %s293 = smul.u32 %s292, 2
        %s294 = smul.u32 32, %s22
        %p295 = scmp.lt.s32.totalorder %s294, 31
        %s296 = scalar_select %p295, %s294, 31
        %s297 = smul.addr %s296, 4
        %s298 = scalar_lea.vmem %s1, %s297
        %s299 = smul.u32 32, %s22
        %s300 = smul.u32 2, %s21
        %s301 = ssub.s32 3, %s300
        %p302 = scmp.lt.s32.totalorder %s301, 2
        %s303 = scalar_select %p302, %s301, 2
        %s304 = smul.u32 128, %s303
        %p306 = scmp.eq.s32.totalorder %s22, 0
        // Predicated region
        $region41: #{discriminator_forward.1} parent=39 // pred_check
          %p307 = pneg %p306
        $region42: #{discriminator_forward.1} parent=39 // pred_check_branch
          %309 = sbr.rel (%p307) target = $region44
        $region43: #{discriminator_forward.1} parent=39 // pred_region
          %310 = vst [vmem:[#allocation2] sm:$0xff] 0.0
          %311 = vst [vmem:[#allocation2 + $0x8] sm:$0xff] 0.0
        $region44: #{discriminator_forward.1} parent=39 // pred_fallthru
          _
        %v312 = vld [vmem:[#allocation2] sm:$0xff]
        %v313 = vld [vmem:[#allocation2 + $0x8] sm:$0xff]
        %v314 = vld [vmem:[%s286] sm:$0xff]
        %v315 = vld [vmem:[%s286 + $0x8] sm:$0xff]
        %v316 = vld [vmem:[%s298] sm:$0xf]
        %v317 = vld [vmem:[%s298 + $0x4] sm:$0xf]
        %v318 = vld [vmem:[%s298 + $0x8] sm:$0xf]
        %v319 = vld [vmem:[%s298 + $0xc] sm:$0xf]
        %v320 = vld [vmem:[%s298 + $0x10] sm:$0xf]
        %v321 = vld [vmem:[%s298 + $0x14] sm:$0xf]
        %v322 = vld [vmem:[%s298 + $0x18] sm:$0xf]
        %v323 = vld [vmem:[%s298 + $0x1c] sm:$0xf]
        %v324 = vld [vmem:[%s298 + $0x20] sm:$0xf]
        %v325 = vld [vmem:[%s298 + $0x24] sm:$0xf]
        %v326 = vld [vmem:[%s298 + $0x28] sm:$0xf]
        %v327 = vld [vmem:[%s298 + $0x2c] sm:$0xf]
        %v328 = vld [vmem:[%s298 + $0x30] sm:$0xf]
        %v329 = vld [vmem:[%s298 + $0x34] sm:$0xf]
        %v330 = vld [vmem:[%s298 + $0x38] sm:$0xf]
        %v331 = vld [vmem:[%s298 + $0x3c] sm:$0xf]
        %v332 = vld [vmem:[%s298 + $0x40] sm:$0xf]
        %v333 = vld [vmem:[%s298 + $0x44] sm:$0xf]
        %v334 = vld [vmem:[%s298 + $0x48] sm:$0xf]
        %v335 = vld [vmem:[%s298 + $0x4c] sm:$0xf]
        %v336 = vld [vmem:[%s298 + $0x50] sm:$0xf]
        %v337 = vld [vmem:[%s298 + $0x54] sm:$0xf]
        %v338 = vld [vmem:[%s298 + $0x58] sm:$0xf]
        %v339 = vld [vmem:[%s298 + $0x5c] sm:$0xf]
        %v340 = vld [vmem:[%s298 + $0x60] sm:$0xf]
        %v341 = vld [vmem:[%s298 + $0x64] sm:$0xf]
        %v342 = vld [vmem:[%s298 + $0x68] sm:$0xf]
        %v343 = vld [vmem:[%s298 + $0x6c] sm:$0xf]
        %v344 = vld [vmem:[%s298 + $0x70] sm:$0xf]
        %v345 = vld [vmem:[%s298 + $0x74] sm:$0xf]
        %v346 = vld [vmem:[%s298 + $0x78] sm:$0xf]
        %v347 = vld [vmem:[%s298 + $0x7c] sm:$0xf]
        %v350 = vunpack.c.l.b16 %v314
        %v351 = vunpack.c.h.b16 %v314
        %v352 = vunpack.c.l.b16 %v315
        %v353 = vunpack.c.h.b16 %v315
        %v354 = vpack.c.b16 %v352, %v350
        %v355 = vpack.c.b16 %v353, %v351
        %v390 = vunpack.c.l.b16 %v316
        %v391 = vunpack.c.l.b16 %v317
        %v392 = vunpack.c.l.b16 %v318
        %v393 = vunpack.c.l.b16 %v319
        %v394 = vunpack.c.l.b16 %v320
        %v395 = vunpack.c.l.b16 %v321
        %v396 = vunpack.c.l.b16 %v322
        %v397 = vunpack.c.l.b16 %v323
        %v398 = vunpack.c.l.b16 %v324
        %v399 = vunpack.c.l.b16 %v325
        %v400 = vunpack.c.l.b16 %v326
        %v401 = vunpack.c.l.b16 %v327
        %v402 = vunpack.c.l.b16 %v328
        %v403 = vunpack.c.l.b16 %v329
        %v404 = vunpack.c.l.b16 %v330
        %v405 = vunpack.c.l.b16 %v331
        %v406 = vunpack.c.l.b16 %v332
        %v407 = vunpack.c.l.b16 %v333
        %v408 = vunpack.c.l.b16 %v334
        %v409 = vunpack.c.l.b16 %v335
        %v410 = vunpack.c.l.b16 %v336
        %v411 = vunpack.c.l.b16 %v337
        %v412 = vunpack.c.l.b16 %v338
        %v413 = vunpack.c.l.b16 %v339
        %v414 = vunpack.c.l.b16 %v340
        %v415 = vunpack.c.l.b16 %v341
        %v416 = vunpack.c.l.b16 %v342
        %v417 = vunpack.c.l.b16 %v343
        %v418 = vunpack.c.l.b16 %v344
        %v419 = vunpack.c.l.b16 %v345
        %v420 = vunpack.c.l.b16 %v346
        %v421 = vunpack.c.l.b16 %v347
        %v422 = vpack.c.b16 %v391, %v390
        %v423 = vpack.c.b16 %v393, %v392
        %v424 = vpack.c.b16 %v395, %v394
        %v425 = vpack.c.b16 %v397, %v396
        %v426 = vpack.c.b16 %v399, %v398
        %v427 = vpack.c.b16 %v401, %v400
        %v428 = vpack.c.b16 %v403, %v402
        %v429 = vpack.c.b16 %v405, %v404
        %v430 = vpack.c.b16 %v407, %v406
        %v431 = vpack.c.b16 %v409, %v408
        %v432 = vpack.c.b16 %v411, %v410
        %v433 = vpack.c.b16 %v413, %v412
        %v434 = vpack.c.b16 %v415, %v414
        %v435 = vpack.c.b16 %v417, %v416
        %v436 = vpack.c.b16 %v419, %v418
        %v437 = vpack.c.b16 %v421, %v420
        %454 = vmatprep.subr.bf16.mxu0 0
        %455 = vmatpush1.bf16.msra.mxu0 %v422
        %456 = vmatprep.subr.bf16.mxu0 0
        %457 = vmatpush1.bf16.msra.mxu0 %v423
        %458 = vmatprep.subr.bf16.mxu0 0
        %459 = vmatpush1.bf16.msra.mxu0 %v424
        %460 = vmatprep.subr.bf16.mxu0 0
        %461 = vmatpush1.bf16.msra.mxu0 %v425
        %462 = vmatprep.subr.bf16.mxu0 0
        %463 = vmatpush1.bf16.msra.mxu0 %v426
        %464 = vmatprep.subr.bf16.mxu0 0
        %465 = vmatpush1.bf16.msra.mxu0 %v427
        %466 = vmatprep.subr.bf16.mxu0 0
        %467 = vmatpush1.bf16.msra.mxu0 %v428
        %468 = vmatprep.subr.bf16.mxu0 0
        %469 = vmatpush1.bf16.msra.mxu0 %v429
        %470 = vmatprep.subr.bf16.mxu0 0
        %471 = vmatpush1.bf16.msra.mxu0 %v430
        %472 = vmatprep.subr.bf16.mxu0 0
        %473 = vmatpush1.bf16.msra.mxu0 %v431
        %474 = vmatprep.subr.bf16.mxu0 0
        %475 = vmatpush1.bf16.msra.mxu0 %v432
        %476 = vmatprep.subr.bf16.mxu0 0
        %477 = vmatpush1.bf16.msra.mxu0 %v433
        %478 = vmatprep.subr.bf16.mxu0 0
        %479 = vmatpush1.bf16.msra.mxu0 %v434
        %480 = vmatprep.subr.bf16.mxu0 0
        %481 = vmatpush1.bf16.msra.mxu0 %v435
        %482 = vmatprep.subr.bf16.mxu0 0
        %483 = vmatpush1.bf16.msra.mxu0 %v436
        %484 = vmatprep.subr.bf16.mxu0 0
        %485 = vmatpush1.bf16.msra.mxu0 %v437
        %486 = vmatprep.mubr.bf16.mxu0 %v355
        %487 = vmatmul.mubr.bf16.gmra.mrb[0].mxu0 %v354
        %v488 = vpop.f32.mrb[0].mxu0
        %v489 = vadd.f32 0.0, %v488
        %v490 = vpop.f32.mrb[0].mxu0
        %v491 = vpop.f32.mrb[0].mxu0
        %v492 = vadd.f32 0.0, %v491
        %v493 = vpop.f32.mrb[0].mxu0
        %494 = vdwg.mxu0
        %v495 = vadd.f32 %v312, %v489
        %v496 = vadd.f32 %v313, %v492
        %497 = vst [vmem:[#allocation2] sm:$0xff] %v495
        %498 = vst [vmem:[#allocation2 + $0x8] sm:$0xff] %v496
        // Predicated region
        $region45: #{discriminator_forward.1} parent=39 // pred_check
          %p499 = pneg %p306
        $region46: #{discriminator_forward.1} parent=39 // pred_check_branch
          %501 = sbr.rel (%p499) target = $region48
        $region47: #{discriminator_forward.1} parent=39 // pred_region
          %v502 = vld [vmem:[#allocation2] sm:$0xff]
          %v503 = vld [vmem:[#allocation2 + $0x8] sm:$0xff]
          %v504 = vld [vmem:[%s2] sm:$0x1]
          %v506 = vlaneseq
          %v507 = vshrl.u32 %v506, 7
          %v508 = vsub.s32 0, %v507
          %v509 = vrot.slane %v504, %v508
          %v511 = vadd.f32 %v502, %v509
          %v512 = vadd.f32 %v503, %v509
          %v513 = vmax.f32 %v511, 0.0
          %v514 = vmax.f32 %v512, 0.0
          %v515 = vld [vmem:[%s3] sm:$0x1]
          %v517 = vlaneseq
          %v518 = vshrl.u32 %v517, 7
          %v519 = vsub.s32 0, %v518
          %v520 = vrot.slane %v515, %v519
          %v522 = vmul.f32 %v513, %v520
          %v523 = vmul.f32 %v514, %v520
          %524 = vadd.xlane.f32.xlu0 %v522
          %v525 = vpop.xlane.xlu0 %524
          %526 = vadd.xlane.f32.xlu0 %v523
          %v527 = vpop.xlane.xlu0 %526
          %s528 = sld [smem:[#allocation3]]
          %v529 = vstv %s528
          %v530 = vadd.f32 %v525, %v529
          %v531 = vadd.f32 %v527, %v529
          %v532 = vsub.f32 0.0, %v530
          %v533 = vsub.f32 0.0, %v531
          %v534 = vmul.f32 %v532, 1.442695
          %v535 = vpow.pop %v534
          %v536 = vmul.f32 %v533, 1.442695
          %v537 = vpow.pop %v536
          %v538 = vadd.f32 %v535, 1.0
          %v539 = vadd.f32 %v537, 1.0
          %v540 = vrcp.pop %v538
          %v541 = vmul.f32 1.0, %v540
          %v542 = vrcp.pop %v539
          %v543 = vmul.f32 1.0, %v542
          %vm544 = vcmask 7168
          %545 = vst.msk [vmem:[%s271] sm:$0xff] %vm544, %v541
          %546 = vst.msk [vmem:[%s271 + $0x8] sm:$0xff] %vm544, %v543
        $region48: #{discriminator_forward.1} parent=39 // pred_fallthru
          _
        %s547 = sand.u32 %s154, 1
        %s548 = sand.u32 %s154, 1
        %s549 = smul.addr %s548, 16
        %s550 = scalar_lea.vmem [#allocation4], %s549
        // Predicated region
        $region49: #{discriminator_forward.1} parent=39 // pred_check
          %p551 = pneg %p164
        $region50: #{discriminator_forward.1} parent=39 // pred_check_branch
          %553 = sbr.rel (%p551) target = $region52
        $region51: #{discriminator_forward.1} parent=39 // pred_region
          %s554 = smul.u32 2, %s21
          %s555 = ssub.s32 3, %s554
          %p556 = scmp.lt.s32.totalorder %s555, 2
          %s557 = scalar_select %p556, %s555, 2
          %s558 = smul.u32 128, %s557
          %p559 = scmp.ne.s32.totalorder 0, %s558
          %s560 = smul.addr %s554, 8
          %s561 = scalar_lea.vmem %s5, %s560
          // Predicated region
          $region53: #{discriminator_forward.1} parent=51 // pred_check
            %p562 = pneg %p559
          $region54: #{discriminator_forward.1} parent=51 // pred_check_branch
            %564 = sbr.rel (%p562) target = $region56
          $region55: #{discriminator_forward.1} parent=51 // pred_region
            // Predicated region
            $region57: #{discriminator_forward.1} parent=55 // pred_check
              _
            $region58: #{discriminator_forward.1} parent=55 // pred_check_branch
              %566 = sbr.rel (0) target = $region60
            $region59: #{discriminator_forward.1} parent=55 // pred_region
              // Predicated region
              $region79: #{discriminator_forward.1} parent=59 // pred_check
                _
              $region80: #{discriminator_forward.1} parent=59 // pred_check_branch
                %617 = sbr.rel (0) target = $region82
              $region81: #{discriminator_forward.1} parent=59 // pred_region
                %s618 = sshrl.u32 %s557, 1
                // While loop
                $region83: #{discriminator_forward.1} parent=81 // loop_pre_header
                  _
                $region84: #{discriminator_forward.1} parent=81 // loop_header
                  %s620 = sphi 0, %s622
                  %p621 = scmp.ge.s32.totalorder %s620, %s618
                  %s625 = sphi 0, %s634
                  %s626 = sphi %s550, %s637
                  %s627 = sphi %s561, %s638
                $region85: #{discriminator_forward.1} parent=81 // loop_header_branch
                  %624 = sbr.rel (%p621) target = $region89
                $region86: #{discriminator_forward.1} parent=81 // loop_body
                  %v628 = vld [vmem:[%s626] sm:$0xff]
                  %629 = vst [vmem:[%s627] sm:$0xff] %v628
                  %v630 = vld [vmem:[%s626 + $0x8] sm:$0xff]
                  %631 = vst [vmem:[%s627 + $0x8] sm:$0xff] %v630
                  %s632 = sadd.s32 1, %s625
                  %p633 = scmp.ge.s32.totalorder %s632, %s618
                  %s634 = scalar_select %p633, 0, %s632
                  %s635 = smul.u32 %s634, 16
                  %s636 = smul.u32 %s634, 16
                  %s637 = scalar_lea.vmem %s550, %s635 [#allocation4]
                  %s638 = scalar_lea.vmem %s561, %s636
                $region87: #{discriminator_forward.1} parent=81 // loop_footer
                  %s622 = sadd.s32 %s620, 1
                $region88: #{discriminator_forward.1} parent=81 // loop_footer_branch
                  %619 = sbr.rel target = $region84
                $region89: #{discriminator_forward.1} parent=81 // loop_exit
                  _
                %s639 = sshrl.u32 %s557, 1
                %s640 = sand.u32 %s557, 1
                %s641 = smul.u32 %s639, 2
                %s642 = smul.u32 8, %s641
                %s643 = scalar_lea.vmem %s550, %s642 [#allocation4]
                %s644 = smul.u32 8, %s641
                %s645 = scalar_lea.vmem %s561, %s644
                // While loop
                $region90: #{discriminator_forward.1} parent=81 // loop_pre_header
                  _
                $region91: #{discriminator_forward.1} parent=81 // loop_header
                  %s647 = sphi 0, %s649
                  %p648 = scmp.ge.s32.totalorder %s647, %s640
                  %s652 = sphi 0, %s659
                  %s653 = sphi %s643, %s662
                  %s654 = sphi %s645, %s663
                $region92: #{discriminator_forward.1} parent=81 // loop_header_branch
                  %651 = sbr.rel (%p648) target = $region96
                $region93: #{discriminator_forward.1} parent=81 // loop_body
                  %v655 = vld [vmem:[%s653] sm:$0xff]
                  %656 = vst [vmem:[%s654] sm:$0xff] %v655
                  %s657 = sadd.s32 1, %s652
                  %p658 = scmp.ge.s32.totalorder %s657, %s640
                  %s659 = scalar_select %p658, 0, %s657
                  %s660 = smul.u32 %s659, 8
                  %s661 = smul.u32 %s659, 8
                  %s662 = scalar_lea.vmem %s643, %s660 [#allocation4]
                  %s663 = scalar_lea.vmem %s645, %s661
                $region94: #{discriminator_forward.1} parent=81 // loop_footer
                  %s649 = sadd.s32 %s647, 1
                $region95: #{discriminator_forward.1} parent=81 // loop_footer_branch
                  %646 = sbr.rel target = $region91
                $region96: #{discriminator_forward.1} parent=81 // loop_exit
                  _
              $region82: #{discriminator_forward.1} parent=59 // pred_fallthru
                _
              // Predicated region
              $region97: #{discriminator_forward.1} parent=59 // pred_check
                _
              $region98: #{discriminator_forward.1} parent=59 // pred_check_branch
                %665 = sbr.rel target = $region100
              $region99: #{discriminator_forward.1} parent=59 // pred_region
                _
              $region100: #{discriminator_forward.1} parent=59 // pred_fallthru
                _
            $region60: #{discriminator_forward.1} parent=55 // pred_fallthru
              _
            // Predicated region
            $region61: #{discriminator_forward.1} parent=55 // pred_check
              _
            $region62: #{discriminator_forward.1} parent=55 // pred_check_branch
              %568 = sbr.rel target = $region64
            $region63: #{discriminator_forward.1} parent=55 // pred_region
              %s570 = sshrl.u32 %s557, 1
              // While loop
              $region65: #{discriminator_forward.1} parent=63 // loop_pre_header
                _
              $region66: #{discriminator_forward.1} parent=63 // loop_header
                %s572 = sphi 0, %s574
                %p573 = scmp.ge.s32.totalorder %s572, %s570
                %s577 = sphi 0, %s586
                %s578 = sphi %s550, %s589
                %s579 = sphi %s561, %s590
              $region67: #{discriminator_forward.1} parent=63 // loop_header_branch
                %576 = sbr.rel (%p573) target = $region71
              $region68: #{discriminator_forward.1} parent=63 // loop_body
                %v580 = vld [vmem:[%s578] sm:$0xff]
                %581 = vst [vmem:[%s579] sm:$0xff] %v580
                %v582 = vld [vmem:[%s578 + $0x8] sm:$0xff]
                %583 = vst [vmem:[%s579 + $0x8] sm:$0xff] %v582
                %s584 = sadd.s32 1, %s577
                %p585 = scmp.ge.s32.totalorder %s584, %s570
                %s586 = scalar_select %p585, 0, %s584
                %s587 = smul.u32 %s586, 16
                %s588 = smul.u32 %s586, 16
                %s589 = scalar_lea.vmem %s550, %s587 [#allocation4]
                %s590 = scalar_lea.vmem %s561, %s588
              $region69: #{discriminator_forward.1} parent=63 // loop_footer
                %s574 = sadd.s32 %s572, 1
              $region70: #{discriminator_forward.1} parent=63 // loop_footer_branch
                %571 = sbr.rel target = $region66
              $region71: #{discriminator_forward.1} parent=63 // loop_exit
                _
              %s591 = sshrl.u32 %s557, 1
              %s592 = sand.u32 %s557, 1
              %s593 = smul.u32 %s591, 2
              %s594 = smul.u32 8, %s593
              %s595 = scalar_lea.vmem %s550, %s594 [#allocation4]
              %s596 = smul.u32 8, %s593
              %s597 = scalar_lea.vmem %s561, %s596
              // While loop
              $region72: #{discriminator_forward.1} parent=63 // loop_pre_header
                _
              $region73: #{discriminator_forward.1} parent=63 // loop_header
                %s599 = sphi 0, %s601
                %p600 = scmp.ge.s32.totalorder %s599, %s592
                %s604 = sphi 0, %s611
                %s605 = sphi %s595, %s614
                %s606 = sphi %s597, %s615
              $region74: #{discriminator_forward.1} parent=63 // loop_header_branch
                %603 = sbr.rel (%p600) target = $region78
              $region75: #{discriminator_forward.1} parent=63 // loop_body
                %v607 = vld [vmem:[%s605] sm:$0xff]
                %608 = vst [vmem:[%s606] sm:$0xff] %v607
                %s609 = sadd.s32 1, %s604
                %p610 = scmp.ge.s32.totalorder %s609, %s592
                %s611 = scalar_select %p610, 0, %s609
                %s612 = smul.u32 %s611, 8
                %s613 = smul.u32 %s611, 8
                %s614 = scalar_lea.vmem %s595, %s612 [#allocation4]
                %s615 = scalar_lea.vmem %s597, %s613
              $region76: #{discriminator_forward.1} parent=63 // loop_footer
                %s601 = sadd.s32 %s599, 1
              $region77: #{discriminator_forward.1} parent=63 // loop_footer_branch
                %598 = sbr.rel target = $region73
              $region78: #{discriminator_forward.1} parent=63 // loop_exit
                _
            $region64: #{discriminator_forward.1} parent=55 // pred_fallthru
              _
          $region56: #{discriminator_forward.1} parent=51 // pred_fallthru
            _
          %666 = vnop
        $region52: #{discriminator_forward.1} parent=39 // pred_fallthru
          _
      $region40: #{discriminator_forward.1} parent=5 // pred_fallthru
        _
      %p667 = scmp.le.s32.totalorder 2, %s12
      // Predicated region
      $region101: #{discriminator_forward.1} parent=5 // pred_check
        %p668 = pneg %p667
      $region102: #{discriminator_forward.1} parent=5 // pred_check_branch
        %670 = sbr.rel (%p668) target = $region104
      $region103: #{discriminator_forward.1} parent=5 // pred_region
        %s671 = ssub.s32 %s12, 2
        // Predicated region
        $region105: #{discriminator_forward.1} parent=103 // pred_check
          %p672 = pneg %p170
        $region106: #{discriminator_forward.1} parent=103 // pred_check_branch
          %674 = sbr.rel (%p672) target = $region108
        $region107: #{discriminator_forward.1} parent=103 // pred_region
          %s675 = sand.u32 %s155, 1
          %s676 = sand.u32 %s155, 1
          %s677 = smul.addr %s676, 16
          %s678 = scalar_lea.vmem [#allocation4], %s677
        $region108: #{discriminator_forward.1} parent=103 // pred_fallthru
          _
      $region104: #{discriminator_forward.1} parent=5 // pred_fallthru
        _
    $region6: #{discriminator_forward.1} parent=1 // loop_footer
      %s16 = sadd.s32 1, %s12
    $region7: #{discriminator_forward.1} parent=1 // loop_footer_branch
      %11 = sbr.rel target = $region3
    $region8: #{discriminator_forward.1} parent=1 // loop_exit
      _

</llo_original>
